<compile_context>
chip_gen: v7x
topology: tpu7x:2x2x1
jax: 0.10.0
libtpu: 0.0.40
codegen_flags: <defaults>
</compile_context>

<pallas_src>
import functools
import math

import jax
import jax.numpy as jnp
from jax import lax
from jax.experimental import pallas as pl
from jax.experimental.pallas import tpu as pltpu


_INV_SQRT2 = 0.7071067811865476
_SQRT_2_OVER_PI = 0.7978845608028654


def _round_up(x, m):
    return (x + m - 1) // m * m


def _cdiv(a, b):
    return (a + b - 1) // b


def _vmem_capacity_bytes():
    try:
        return int(pltpu.get_tpu_info().vmem_capacity_bytes)
    except Exception:
        return 128 << 20  # v5e/v6e physical VMEM; conservative fallback.


@functools.lru_cache(maxsize=None)
def _buffered_one_supported():
    """Probe once whether pipeline_mode=pl.Buffered(1) compiles+runs here."""
    try:
        def k(x_ref, o_ref):
            o_ref[...] = x_ref[...] + 1.0

        f = pl.pallas_call(
            k,
            out_shape=jax.ShapeDtypeStruct((8, 128), jnp.float32),
            grid=(1,),
            in_specs=[pl.BlockSpec((8, 128), lambda i: (0, 0),
                                   pipeline_mode=pl.Buffered(1))],
            out_specs=pl.BlockSpec((8, 128), lambda i: (0, 0)),
        )
        jax.block_until_ready(f(jnp.zeros((8, 128), jnp.float32)))
        return True
    except Exception:
        return False


def _gelu_f32(x, approximate):
    if approximate:
        # tanh approximation -> EUP slot (frees VALU); opt-in only.
        return 0.5 * x * (1.0 + jnp.tanh(_SQRT_2_OVER_PI * (x + 0.044715 * x * x * x)))
    # Exact erf GELU (matches torch.nn.GELU() default).
    return 0.5 * x * (1.0 + lax.erf(x * _INV_SQRT2))


def _mlp_kernel_single(x_ref, w1_ref, b1_ref, w2_ref, b2_ref, o_ref, *, approximate):
    # Whole hidden dim resident: fc1 -> GELU -> fc2 -> GELU, no accumulator.
    h = jnp.dot(x_ref[...], w1_ref[...], preferred_element_type=jnp.float32)
    h = _gelu_f32(h + b1_ref[...].astype(jnp.float32), approximate)
    y = jnp.dot(h.astype(w2_ref.dtype), w2_ref[...],
                preferred_element_type=jnp.float32)
    y = _gelu_f32(y + b2_ref[...].astype(jnp.float32), approximate)
    o_ref[...] = y.astype(o_ref.dtype)


def _mlp_kernel_chunked(x_ref, w1_ref, b1_ref, w2_ref, b2_ref, o_ref, acc_ref, *,
                        approximate):
    j = pl.program_id(1)  # hidden-chunk (reduction) axis

    @pl.when(j == 0)
    def _():
        acc_ref[...] = jnp.zeros_like(acc_ref)

    h = jnp.dot(x_ref[...], w1_ref[...], preferred_element_type=jnp.float32)
    h = _gelu_f32(h + b1_ref[...].astype(jnp.float32), approximate)
    acc_ref[...] += jnp.dot(h.astype(w2_ref.dtype), w2_ref[...],
                            preferred_element_type=jnp.float32)

    @pl.when(j == pl.num_programs(1) - 1)
    def _():
        y = _gelu_f32(acc_ref[...] + b2_ref[...].astype(jnp.float32), approximate)
        o_ref[...] = y.astype(o_ref.dtype)


def _maybe_pad2d(a, rows, cols):
    r, c = a.shape
    if r == rows and c == cols:
        return a
    return jnp.pad(a, ((0, rows - r), (0, cols - c)))


def _mlp_forward_impl(x_bnc, w1, b1, w2, b2, *, tm_max, approximate_gelu,
                      force_hidden_chunk, single_buffer_ok):
    """x_bnc: (B, N, C); w1: (C, hid); b1: (1, hid); w2: (hid, out); b2: (1, out)."""
    B, N, C = x_bnc.shape
    in_f, hid = w1.shape
    hid2, out_f = w2.shape
    assert in_f == C and hid2 == hid
    assert b1.shape == (1, hid) and b2.shape == (1, out_f)

    M = B * N
    x2d = x_bnc.reshape(M, C)

    xbytes = jnp.dtype(x_bnc.dtype).itemsize
    wbytes = jnp.dtype(w1.dtype).itemsize
    cast_h = jnp.dtype(w2.dtype) != jnp.dtype(jnp.float32)
    hbytes = 4 + (wbytes if cast_h else 0)  # f32 intermediate h (+ cast copy)

    # Lane alignment (128); use 256 (v6e/v7x MXU width) only when it adds no padding.
    in_p = _round_up(in_f, 128)
    out_align = 256 if _round_up(out_f, 256) == _round_up(out_f, 128) else 128
    out_p = _round_up(out_f, out_align)
    hid_align = 256 if _round_up(hid, 256) == _round_up(hid, 128) else 128
    hid_p = _round_up(hid, hid_align)

    vmem_cap = _vmem_capacity_bytes()
    rows128 = _round_up(M, 128) // 128

    def pick_tm(tmax):
        tmb = max(1, min(tmax // 128, rows128))
        if rows128 >= 2:  # keep >= 2 row tiles so both TCs get work (v7x)
            tmb = min(tmb, _cdiv(rows128, 2))
        return tmb * 128

    tm = pick_tm(tm_max)

    # --- Fully-resident weights (single hidden chunk) vs chunked reduction.
    w_buf_factor = 1 if single_buffer_ok else 2
    w_full_bytes = (in_p * hid_p + hid_p * out_p + hid_p + out_p) * wbytes * w_buf_factor
    act_bytes = 2 * tm * in_p * xbytes + 2 * tm * out_p * xbytes + tm * hid_p * hbytes
    if force_hidden_chunk is not None:
        single_chunk = _round_up(min(force_hidden_chunk, hid_p), hid_align) >= hid_p
    else:
        single_chunk = (w_full_bytes + act_bytes) <= int(vmem_cap * 0.85)

    if single_chunk:
        th = hid_p
        n_chunks = 1
    else:
        # Larger row tile when chunking: weight re-streaming scales with m_p/tm.
        tm = pick_tm(max(tm_max, 512))
        if force_hidden_chunk is not None:
            th_max = max(hid_align,
                         _round_up(min(force_hidden_chunk, hid_p), hid_align))
        else:
            fixed = (2 * tm * in_p * xbytes + 2 * tm * out_p * xbytes
                     + tm * out_p * 4 + 2 * out_p * wbytes)
            per_col = 2 * (in_p + out_p + 1) * wbytes + tm * hbytes
            budget = int(vmem_cap * 0.80) - fixed
            th_max = max(hid_align, (budget // per_col) // hid_align * hid_align)
        # Balanced chunks (no blow-up from rounding hid_p to a multiple of th).
        n_chunks = _cdiv(hid_p, th_max)
        th = _round_up(_cdiv(hid_p, n_chunks), hid_align)
        hid_p = n_chunks * th

    m_p = _round_up(M, tm)
    grid_rows = m_p // tm

    # Zero padding (exactly preserved through dot / bias / GELU); no-op copies
    # are skipped entirely when dims are already aligned.
    x_p = _maybe_pad2d(x2d, m_p, in_p)
    w1_p = _maybe_pad2d(w1, in_p, hid_p)
    b1_p = _maybe_pad2d(b1, 1, hid_p)
    w2_p = _maybe_pad2d(w2, hid_p, out_p)
    b2_p = _maybe_pad2d(b2, 1, out_p)

    gelu_transc = 1 if approximate_gelu else 4  # erf ~ several transcendentals
    w_stream = 1 if single_chunk else grid_rows  # weights re-streamed per row tile
    cost = pl.CostEstimate(
        flops=2 * M * (in_f * hid + hid * out_f),
        transcendentals=gelu_transc * M * (hid + out_f),
        bytes_accessed=(
            M * in_f * xbytes
            + w_stream * (in_f * hid + hid + hid * out_f + out_f) * wbytes
            + M * out_f * xbytes
        ),
    )

    if single_chunk:
        vmem_bytes = (2 * tm * in_p * xbytes
                      + w_buf_factor * (in_p * th + th + th * out_p + out_p) * wbytes
                      + 2 * tm * out_p * xbytes
                      + tm * th * hbytes)
        vmem_limit = int(min(vmem_cap * 0.98,
                             max(vmem_bytes * 1.25 + (2 << 20), 32 << 20)))

        def resident_spec(shape):
            if single_buffer_ok:
                return pl.BlockSpec(shape, lambda i: (0, 0),
                                    pipeline_mode=pl.Buffered(1))
            return pl.BlockSpec(shape, lambda i: (0, 0))

        out_pad = pl.pallas_call(
            functools.partial(_mlp_kernel_single, approximate=approximate_gelu),
            out_shape=jax.ShapeDtypeStruct((m_p, out_p), x_bnc.dtype),
            grid_spec=pltpu.PrefetchScalarGridSpec(
                num_scalar_prefetch=0,
                grid=(grid_rows,),
                in_specs=[
                    pl.BlockSpec((tm, in_p), lambda i: (i, 0)),   # x row tile
                    resident_spec((in_p, th)),                    # w1 (resident)
                    resident_spec((1, th)),                       # b1
                    resident_spec((th, out_p)),                   # w2 (resident)
                    resident_spec((1, out_p)),                    # b2
                ],
                out_specs=pl.BlockSpec((tm, out_p), lambda i: (i, 0)),
            ),
            compiler_params=pltpu.CompilerParams(
                dimension_semantics=("parallel",),
                vmem_limit_bytes=vmem_limit,
            ),
            cost_estimate=cost,
        )(x_p, w1_p, b1_p, w2_p, b2_p)
    else:
        vmem_bytes = (2 * tm * in_p * xbytes
                      + 2 * (in_p * th + th + th * out_p + out_p) * wbytes
                      + 2 * tm * out_p * xbytes
                      + tm * out_p * 4
                      + tm * th * hbytes)
        vmem_limit = int(min(vmem_cap * 0.98,
                             max(vmem_bytes * 1.25 + (2 << 20), 32 << 20)))
        out_pad = pl.pallas_call(
            functools.partial(_mlp_kernel_chunked, approximate=approximate_gelu),
            out_shape=jax.ShapeDtypeStruct((m_p, out_p), x_bnc.dtype),
            grid_spec=pltpu.PrefetchScalarGridSpec(
                num_scalar_prefetch=0,
                grid=(grid_rows, n_chunks),
                in_specs=[
                    pl.BlockSpec((tm, in_p), lambda i, j: (i, 0)),   # x row tile
                    pl.BlockSpec((in_p, th), lambda i, j: (0, j)),   # w1 chunk
                    pl.BlockSpec((1, th), lambda i, j: (0, j)),      # b1 chunk
                    pl.BlockSpec((th, out_p), lambda i, j: (j, 0)),  # w2 chunk
                    pl.BlockSpec((1, out_p), lambda i, j: (0, 0)),   # b2
                ],
                out_specs=pl.BlockSpec((tm, out_p), lambda i, j: (i, 0)),
                scratch_shapes=[pltpu.VMEM((tm, out_p), jnp.float32)],
            ),
            compiler_params=pltpu.CompilerParams(
                dimension_semantics=("parallel", "arbitrary"),
                vmem_limit_bytes=vmem_limit,
            ),
            cost_estimate=cost,
        )(x_p, w1_p, b1_p, w2_p, b2_p)

    if m_p != M or out_p != out_f:
        out_pad = out_pad[:M, :out_f]
    return out_pad.reshape(B, N, out_f)


_mlp_forward_jit = jax.jit(
    _mlp_forward_impl,
    static_argnames=("tm_max", "approximate_gelu", "force_hidden_chunk",
                     "single_buffer_ok"),
)


def mlp_forward(x_bnc, w1, b1, w2, b2, *, tm_max=256, approximate_gelu=False,
                force_hidden_chunk=None):
    return _mlp_forward_jit(
        x_bnc, w1, b1, w2, b2,
        tm_max=tm_max,
        approximate_gelu=approximate_gelu,
        force_hidden_chunk=force_hidden_chunk,
        single_buffer_ok=_buffered_one_supported(),
    )


if __name__ == "__main__":
    # Small shapes consistent with the module: batch=2, seq=8, in=32, hid=64, out=32.
    B, N, IN_F, HID_F, OUT_F = 2, 8, 32, 64, 32

    key = jax.random.PRNGKey(0)
    kx, k1, k2, k3, k4, k5, k6, k7, k8 = jax.random.split(key, 9)
    x = jax.random.normal(kx, (B, N, IN_F), dtype=jnp.float32)

    # nn.Linear-style uniform(-1/sqrt(fan_in), 1/sqrt(fan_in)) init; weights stored
    # as (in, out) so the kernel does x @ W (== x @ W_pt.T).
    bound1 = 1.0 / math.sqrt(IN_F)
    bound2 = 1.0 / math.sqrt(HID_F)
    w1 = jax.random.uniform(k1, (IN_F, HID_F), jnp.float32, -bound1, bound1)
    b1 = jax.random.uniform(k2, (1, HID_F), jnp.float32, -bound1, bound1)
    w2 = jax.random.uniform(k3, (HID_F, OUT_F), jnp.float32, -bound2, bound2)
    b2 = jax.random.uniform(k4, (1, OUT_F), jnp.float32, -bound2, bound2)

    # Pure-JAX reference (fc1 -> GELU -> fc2 -> GELU), highest-precision matmuls.
    def ref(xv, w1v, b1v, w2v, b2v):
        h = jnp.dot(xv, w1v, precision=lax.Precision.HIGHEST) + b1v[0]
        h = 0.5 * h * (1.0 + lax.erf(h * _INV_SQRT2))
        y = jnp.dot(h, w2v, precision=lax.Precision.HIGHEST) + b2v[0]
        y = 0.5 * y * (1.0 + lax.erf(y * _INV_SQRT2))
        return y

    expected = ref(x, w1, b1, w2, b2)

    # f32 path (single-chunk / resident-weight kernel).
    out_f32 = jax.block_until_ready(mlp_forward(x, w1, b1, w2, b2))
    assert out_f32.shape == (B, N, OUT_F)
    assert jnp.allclose(out_f32, expected, atol=2e-3, rtol=2e-3), float(
        jnp.max(jnp.abs(out_f32 - expected)))

    # bf16-input / f32-accumulate path (looser tolerance).
    out_bf16 = jax.block_until_ready(
        mlp_forward(
            x.astype(jnp.bfloat16),
            w1.astype(jnp.bfloat16), b1.astype(jnp.bfloat16),
            w2.astype(jnp.bfloat16), b2.astype(jnp.bfloat16),
        )
    )
    assert out_bf16.shape == (B, N, OUT_F)
    assert jnp.allclose(out_bf16.astype(jnp.float32), expected,
                        atol=5e-2, rtol=5e-2), float(
        jnp.max(jnp.abs(out_bf16.astype(jnp.float32) - expected)))

    # Exercise the hidden-chunked (accumulator) path with a wider hidden dim.
    HID2 = 512
    bound1b = 1.0 / math.sqrt(IN_F)
    bound2b = 1.0 / math.sqrt(HID2)
    w1b = jax.random.uniform(k5, (IN_F, HID2), jnp.float32, -bound1b, bound1b)
    b1b = jax.random.uniform(k6, (1, HID2), jnp.float32, -bound1b, bound1b)
    w2b = jax.random.uniform(k7, (HID2, OUT_F), jnp.float32, -bound2b, bound2b)
    b2b = jax.random.uniform(k8, (1, OUT_F), jnp.float32, -bound2b, bound2b)
    expected_b = ref(x, w1b, b1b, w2b, b2b)
    out_chunked = jax.block_until_ready(
        mlp_forward(x, w1b, b1b, w2b, b2b, force_hidden_chunk=256))
    assert out_chunked.shape == (B, N, OUT_F)
    assert jnp.allclose(out_chunked, expected_b, atol=3e-3, rtol=3e-3), float(
        jnp.max(jnp.abs(out_chunked - expected_b)))

    print("KERNEL_OK")
</pallas_src>

<mosaic_0001>
module attributes {stable_mosaic.version = 11 : i64} {
  func.func @k(%arg0: i32, %arg1: memref<8x128xf32, #tpu.memory_space<vmem>>, %arg2: memref<8x128xf32, #tpu.memory_space<vmem>>) attributes {dimension_semantics = [#tpu.dimension_semantics<arbitrary>], iteration_bounds = array<i64: 1>, scalar_prefetch = 0 : i64, scratch_operands = 0 : i64, tpu.core_type = #tpu.core_type<tc>, window_params = [{pipeline_mode = #tpu.pipeline_mode<synchronous>, transform_indices = @transform_0, window_bounds = array<i64: 8, 128>}, {pipeline_mode = #tpu.pipeline_mode<synchronous>, transform_indices = @transform_1, window_bounds = array<i64: 8, 128>}]} {
    %c0 = arith.constant 0 : index
    %c0_0 = arith.constant 0 : index
    %0 = vector.load %arg1[%c0, %c0_0] : memref<8x128xf32, #tpu.memory_space<vmem>>, vector<8x128xf32>
    %cst = arith.constant 1.000000e+00 : f32
    %1 = vector.broadcast %cst : f32 to vector<8x128xf32>
    %2 = arith.addf %0, %1 : vector<8x128xf32>
    %c0_1 = arith.constant 0 : index
    %c0_2 = arith.constant 0 : index
    %3 = vector.load %arg2[%c0_1, %c0_2] : memref<8x128xf32, #tpu.memory_space<vmem>>, vector<8x128xf32>
    tpu.vector_store %arg2[%c0_1, %c0_2], %2 {strides = array<i32>} : memref<8x128xf32, #tpu.memory_space<vmem>>, vector<8x128xf32>,
    return
  }
  func.func @transform_0(%arg0: i32) -> (i32, i32) {
    %c0_i32 = arith.constant 0 : i32
    %c0_i32_0 = arith.constant 0 : i32
    %c0_i32_1 = arith.constant 0 : i32
    return %c0_i32, %c0_i32_0 : i32, i32
  }
  func.func @transform_1(%arg0: i32) -> (i32, i32) {
    %c0_i32 = arith.constant 0 : i32
    %c0_i32_0 = arith.constant 0 : i32
    %c0_i32_1 = arith.constant 0 : i32
    return %c0_i32, %c0_i32_0 : i32, i32
  }
}

module attributes {stable_mosaic.version = 11 : i64} {
  func.func @_mlp_kernel_single(%arg0: i32, %arg1: memref<128x128xf32, #tpu.memory_space<vmem>>, %arg2: memref<128x128xf32, #tpu.memory_space<vmem>>, %arg3: memref<1x128xf32, #tpu.memory_space<vmem>>, %arg4: memref<128x128xf32, #tpu.memory_space<vmem>>, %arg5: memref<1x128xf32, #tpu.memory_space<vmem>>, %arg6: memref<128x128xf32, #tpu.memory_space<vmem>>) attributes {dimension_semantics = [#tpu.dimension_semantics<parallel>], iteration_bounds = array<i64: 1>, scalar_prefetch = 0 : i64, scratch_operands = 0 : i64, tpu.core_type = #tpu.core_type<tc>, window_params = [{transform_indices = @transform_0, window_bounds = array<i64: 128, 128>}, {pipeline_mode = #tpu.pipeline_mode<synchronous>, transform_indices = @transform_1, window_bounds = array<i64: 128, 128>}, {pipeline_mode = #tpu.pipeline_mode<synchronous>, transform_indices = @transform_2, window_bounds = array<i64: 1, 128>}, {pipeline_mode = #tpu.pipeline_mode<synchronous>, transform_indices = @transform_3, window_bounds = array<i64: 128, 128>}, {pipeline_mode = #tpu.pipeline_mode<synchronous>, transform_indices = @transform_4, window_bounds = array<i64: 1, 128>}, {transform_indices = @transform_5, window_bounds = array<i64: 128, 128>}]} {
    %c0 = arith.constant 0 : index
    %c0_0 = arith.constant 0 : index
    %0 = vector.load %arg1[%c0, %c0_0] : memref<128x128xf32, #tpu.memory_space<vmem>>, vector<128x128xf32>
    %c0_1 = arith.constant 0 : index
    %c0_2 = arith.constant 0 : index
    %1 = vector.load %arg2[%c0_1, %c0_2] : memref<128x128xf32, #tpu.memory_space<vmem>>, vector<128x128xf32>
    %cst = arith.constant dense<0.000000e+00> : vector<128x128xf32>
    %2 = tpu.matmul %0, %1, %cst {dimension_numbers = #tpu.dot_dimension_numbers<[1], [0], [0], [1], [0, 0, 1, 1], [], []>} : vector<128x128xf32>, vector<128x128xf32>, vector<128x128xf32> -> vector<128x128xf32>
    %c0_3 = arith.constant 0 : index
    %c0_4 = arith.constant 0 : index
    %3 = vector.load %arg3[%c0_3, %c0_4] : memref<1x128xf32, #tpu.memory_space<vmem>>, vector<1x128xf32>
    %4 = vector.broadcast %3 : vector<1x128xf32> to vector<128x128xf32>
    %5 = arith.addf %2, %4 : vector<128x128xf32>
    %cst_5 = arith.constant 5.000000e-01 : f32
    %6 = vector.broadcast %cst_5 : f32 to vector<128x128xf32>
    %7 = arith.mulf %6, %5 : vector<128x128xf32>
    %cst_6 = arith.constant 0.707106769 : f32
    %8 = vector.broadcast %cst_6 : f32 to vector<128x128xf32>
    %9 = arith.mulf %5, %8 : vector<128x128xf32>
    %10 = math.erf %9 : vector<128x128xf32>
    %cst_7 = arith.constant 1.000000e+00 : f32
    %11 = vector.broadcast %cst_7 : f32 to vector<128x128xf32>
    %12 = arith.addf %11, %10 : vector<128x128xf32>
    %13 = arith.mulf %7, %12 : vector<128x128xf32>
    %c0_8 = arith.constant 0 : index
    %c0_9 = arith.constant 0 : index
    %14 = vector.load %arg4[%c0_8, %c0_9] : memref<128x128xf32, #tpu.memory_space<vmem>>, vector<128x128xf32>
    %cst_10 = arith.constant dense<0.000000e+00> : vector<128x128xf32>
    %15 = tpu.matmul %13, %14, %cst_10 {dimension_numbers = #tpu.dot_dimension_numbers<[1], [0], [0], [1], [0, 0, 1, 1], [], []>} : vector<128x128xf32>, vector<128x128xf32>, vector<128x128xf32> -> vector<128x128xf32>
    %c0_11 = arith.constant 0 : index
    %c0_12 = arith.constant 0 : index
    %16 = vector.load %arg5[%c0_11, %c0_12] : memref<1x128xf32, #tpu.memory_space<vmem>>, vector<1x128xf32>
    %17 = vector.broadcast %16 : vector<1x128xf32> to vector<128x128xf32>
    %18 = arith.addf %15, %17 : vector<128x128xf32>
    %cst_13 = arith.constant 5.000000e-01 : f32
    %19 = vector.broadcast %cst_13 : f32 to vector<128x128xf32>
    %20 = arith.mulf %19, %18 : vector<128x128xf32>
    %cst_14 = arith.constant 0.707106769 : f32
    %21 = vector.broadcast %cst_14 : f32 to vector<128x128xf32>
    %22 = arith.mulf %18, %21 : vector<128x128xf32>
    %23 = math.erf %22 : vector<128x128xf32>
    %cst_15 = arith.constant 1.000000e+00 : f32
    %24 = vector.broadcast %cst_15 : f32 to vector<128x128xf32>
    %25 = arith.addf %24, %23 : vector<128x128xf32>
    %26 = arith.mulf %20, %25 : vector<128x128xf32>
    %c0_16 = arith.constant 0 : index
    %c0_17 = arith.constant 0 : index
    %27 = vector.load %arg6[%c0_16, %c0_17] : memref<128x128xf32, #tpu.memory_space<vmem>>, vector<128x128xf32>
    tpu.vector_store %arg6[%c0_16, %c0_17], %26 {strides = array<i32>} : memref<128x128xf32, #tpu.memory_space<vmem>>, vector<128x128xf32>,
    return
  }
  func.func @transform_0(%arg0: i32) -> (i32, i32) {
    %c0_i32 = arith.constant 0 : i32
    %c0_i32_0 = arith.constant 0 : i32
    return %arg0, %c0_i32 : i32, i32
  }
  func.func @transform_1(%arg0: i32) -> (i32, i32) {
    %c0_i32 = arith.constant 0 : i32
    %c0_i32_0 = arith.constant 0 : i32
    %c0_i32_1 = arith.constant 0 : i32
    return %c0_i32, %c0_i32_0 : i32, i32
  }
  func.func @transform_2(%arg0: i32) -> (i32, i32) {
    %c0_i32 = arith.constant 0 : i32
    %c0_i32_0 = arith.constant 0 : i32
    %c0_i32_1 = arith.constant 0 : i32
    return %c0_i32, %c0_i32_0 : i32, i32
  }
  func.func @transform_3(%arg0: i32) -> (i32, i32) {
    %c0_i32 = arith.constant 0 : i32
    %c0_i32_0 = arith.constant 0 : i32
    %c0_i32_1 = arith.constant 0 : i32
    return %c0_i32, %c0_i32_0 : i32, i32
  }
  func.func @transform_4(%arg0: i32) -> (i32, i32) {
    %c0_i32 = arith.constant 0 : i32
    %c0_i32_0 = arith.constant 0 : i32
    %c0_i32_1 = arith.constant 0 : i32
    return %c0_i32, %c0_i32_0 : i32, i32
  }
  func.func @transform_5(%arg0: i32) -> (i32, i32) {
    %c0_i32 = arith.constant 0 : i32
    %c0_i32_0 = arith.constant 0 : i32
    return %arg0, %c0_i32 : i32, i32
  }
}

</mosaic_0001>

<llo_original>
// kernel: tpu_custom_call.1
$region0: #{tpu_custom_call.1}
  #allocation0 [shape = 'u32[]', space=smem, size = 0x4, offset = 0x4, fixed_abs, tag = 'smem constant byte address 0x4 - core index']
  #allocation1 [shape = 'u32[144,128]{1,0:T(1,128)}', space=vmem, size = 0x12000, scoped, tag = 'internal scratch']
  %s0 = inlined_call_operand.hbm [shape: f32[8,128], index: 0, kind: input, shape index: {}]
  %s1 = inlined_call_operand.hbm [shape: f32[8,128], index: 1, kind: output, shape index: {}]
  %s2 = sld [smem:[#allocation0]]
  $region18: #{tpu_custom_call.1} parent=0
    _
  %s4 = ssub.s32 1, %s2
  %s5 = scalar_select 0, %s4, %s2
  $region1: #{tpu_custom_call.1} parent=0
    #allocation2 [shape = 'u8[4096]{0}', space=vmem, size = 0x1000, scoped, tag = 'input window, operand 0, single buffered']
    #allocation3 [shape = 's32[1]{0}', space=sflag, size = 0x4, scoped, tag = 'scoped memory for tpu_custom_call.1']
    #allocation4 [shape = 's32[1]{0}', space=sflag, size = 0x4, scoped, tag = 'scoped memory for tpu_custom_call.1']
    #allocation5 [shape = 'u8[4096]{0}', space=vmem, size = 0x1000, scoped, tag = 'output window, operand 0, single buffered']
    %6 = vsyncpa [#allocation3], 0
    %7 = vsyncpa [#allocation4], 0
    // Predicated region
    $region2: #{tpu_custom_call.1} parent=1 // pred_check
      _
    $region3: #{tpu_custom_call.1} parent=1 // pred_check_branch
      %9 = sbr.rel (0) target = $region5
    $region4: #{tpu_custom_call.1} parent=1 // pred_region
      %s11 = ssub.s32 128, 128
      %12 = vsyncadd [#allocation3], %s11
      %s14 = sshll.u32 [#allocation2], 4
      %s15 = int_to_ptr.vmem [resolvable:$true] %s14
      %17 = dma.hbm_to_vmem [thread:$0]  %s0, 128, %s15, [#allocation3]
    $region5: #{tpu_custom_call.1} parent=1 // pred_fallthru
      _
    // Predicated region
    $region6: #{tpu_custom_call.1} parent=1 // pred_check
      _
    $region7: #{tpu_custom_call.1} parent=1 // pred_check_branch
      %19 = sbr.rel (0) target = $region9
    $region8: #{tpu_custom_call.1} parent=1 // pred_region
      %20 = dma.done [#allocation3], 128
    $region9: #{tpu_custom_call.1} parent=1 // pred_fallthru
      _
    %v21 = vld [vmem:[#allocation2] sm:$0xff]
    %v22 = vadd.f32 %v21, 1.0
    %23 = vst [vmem:[#allocation5] sm:$0xff] %v22
    // Predicated region
    $region10: #{tpu_custom_call.1} parent=1 // pred_check
      _
    $region11: #{tpu_custom_call.1} parent=1 // pred_check_branch
      %25 = sbr.rel (0) target = $region13
    $region12: #{tpu_custom_call.1} parent=1 // pred_region
      %s27 = ssub.s32 128, 128
      %28 = vsyncadd [#allocation4], %s27
      %s30 = sshll.u32 [#allocation5], 4
      %s31 = int_to_ptr.vmem [resolvable:$true] %s30
      %33 = dma.vmem_to_hbm [thread:$0]  %s31, 128, %s1, [#allocation4]
    $region13: #{tpu_custom_call.1} parent=1 // pred_fallthru
      _
    // Predicated region
    $region14: #{tpu_custom_call.1} parent=1 // pred_check
      _
    $region15: #{tpu_custom_call.1} parent=1 // pred_check_branch
      %35 = sbr.rel (0) target = $region17
    $region16: #{tpu_custom_call.1} parent=1 // pred_region
      %36 = dma.done [#allocation4], 128
    $region17: #{tpu_custom_call.1} parent=1 // pred_fallthru
      _
    %37 = vsyncpa [#allocation3], 1
    %38 = vsyncpa [#allocation4], 1

// kernel: _mlp_forward_impl.1
$region0: #{_mlp_forward_impl.1}
  #allocation0 [shape = 'u32[]', space=smem, size = 0x4, offset = 0x4, fixed_abs, tag = 'smem constant byte address 0x4 - core index']
  #allocation1 [shape = 'u32[144,128]{1,0:T(1,128)}', space=vmem, size = 0x12000, scoped, tag = 'internal scratch']
  %s0 = inlined_call_operand.vmem [shape: f32[128,128], index: 0, kind: input, shape index: {}]
  %s1 = inlined_call_operand.vmem [shape: f32[128,128], index: 1, kind: input, shape index: {}]
  %s2 = inlined_call_operand.vmem [shape: f32[1,128], index: 2, kind: input, shape index: {}]
  %s3 = inlined_call_operand.vmem [shape: f32[128,128], index: 3, kind: input, shape index: {}]
  %s4 = inlined_call_operand.vmem [shape: f32[1,128], index: 4, kind: input, shape index: {}]
  %s5 = inlined_call_operand.vmem [shape: f32[128,128], index: 5, kind: output, shape index: {}]
  %s6 = sld [smem:[#allocation0]]
  $region30: #{_mlp_forward_impl.1} parent=0
    _
  %s8 = ssub.s32 1, %s6
  %s9 = scalar_select 0, %s8, %s6
  // Predicated region
  $region2: #{_mlp_forward_impl.1} parent=0 // pred_check
    _
  $region3: #{_mlp_forward_impl.1} parent=0 // pred_check_branch
    %11 = sbr.rel (0) target = $region5
  $region4: #{_mlp_forward_impl.1} parent=0 // pred_region
    _
  $region5: #{_mlp_forward_impl.1} parent=0 // pred_fallthru
    _
  // Predicated region
  $region6: #{_mlp_forward_impl.1} parent=0 // pred_check
    _
  $region7: #{_mlp_forward_impl.1} parent=0 // pred_check_branch
    %13 = sbr.rel (0) target = $region9
  $region8: #{_mlp_forward_impl.1} parent=0 // pred_region
    _
  $region9: #{_mlp_forward_impl.1} parent=0 // pred_fallthru
    _
  // Predicated region
  $region10: #{_mlp_forward_impl.1} parent=0 // pred_check
    _
  $region11: #{_mlp_forward_impl.1} parent=0 // pred_check_branch
    %15 = sbr.rel (0) target = $region13
  $region12: #{_mlp_forward_impl.1} parent=0 // pred_region
    _
  $region13: #{_mlp_forward_impl.1} parent=0 // pred_fallthru
    _
  // Predicated region
  $region14: #{_mlp_forward_impl.1} parent=0 // pred_check
    _
  $region15: #{_mlp_forward_impl.1} parent=0 // pred_check_branch
    %17 = sbr.rel (0) target = $region17
  $region16: #{_mlp_forward_impl.1} parent=0 // pred_region
    _
  $region17: #{_mlp_forward_impl.1} parent=0 // pred_fallthru
    _
  // Predicated region
  $region18: #{_mlp_forward_impl.1} parent=0 // pred_check
    _
  $region19: #{_mlp_forward_impl.1} parent=0 // pred_check_branch
    %19 = sbr.rel (0) target = $region21
  $region20: #{_mlp_forward_impl.1} parent=0 // pred_region
    _
  $region21: #{_mlp_forward_impl.1} parent=0 // pred_fallthru
    _
  %v20 = vld [vmem:[%s0] sm:$0xff]
  %v21 = vld [vmem:[%s0 + $0x8] sm:$0xff]
  %v22 = vld [vmem:[%s0 + $0x10] sm:$0xff]
  %v23 = vld [vmem:[%s0 + $0x18] sm:$0xff]
  %v24 = vld [vmem:[%s0 + $0x20] sm:$0xff]
  %v25 = vld [vmem:[%s0 + $0x28] sm:$0xff]
  %v26 = vld [vmem:[%s0 + $0x30] sm:$0xff]
  %v27 = vld [vmem:[%s0 + $0x38] sm:$0xff]
  %v28 = vld [vmem:[%s0 + $0x40] sm:$0xff]
  %v29 = vld [vmem:[%s0 + $0x48] sm:$0xff]
  %v30 = vld [vmem:[%s0 + $0x50] sm:$0xff]
  %v31 = vld [vmem:[%s0 + $0x58] sm:$0xff]
  %v32 = vld [vmem:[%s0 + $0x60] sm:$0xff]
  %v33 = vld [vmem:[%s0 + $0x68] sm:$0xff]
  %v34 = vld [vmem:[%s0 + $0x70] sm:$0xff]
  %v35 = vld [vmem:[%s0 + $0x78] sm:$0xff]
  %v36 = vld [vmem:[%s1] sm:$0xff]
  %v37 = vld [vmem:[%s1 + $0x8] sm:$0xff]
  %v38 = vld [vmem:[%s1 + $0x10] sm:$0xff]
  %v39 = vld [vmem:[%s1 + $0x18] sm:$0xff]
  %v40 = vld [vmem:[%s1 + $0x20] sm:$0xff]
  %v41 = vld [vmem:[%s1 + $0x28] sm:$0xff]
  %v42 = vld [vmem:[%s1 + $0x30] sm:$0xff]
  %v43 = vld [vmem:[%s1 + $0x38] sm:$0xff]
  %v44 = vld [vmem:[%s1 + $0x40] sm:$0xff]
  %v45 = vld [vmem:[%s1 + $0x48] sm:$0xff]
  %v46 = vld [vmem:[%s1 + $0x50] sm:$0xff]
  %v47 = vld [vmem:[%s1 + $0x58] sm:$0xff]
  %v48 = vld [vmem:[%s1 + $0x60] sm:$0xff]
  %v49 = vld [vmem:[%s1 + $0x68] sm:$0xff]
  %v50 = vld [vmem:[%s1 + $0x70] sm:$0xff]
  %v51 = vld [vmem:[%s1 + $0x78] sm:$0xff]
  %v52 = vld [vmem:[%s2] sm:$0x1]
  %v54 = vlaneseq
  %v55 = vshrl.u32 %v54, 7
  %v56 = vsub.s32 0, %v55
  %v57 = vrot.slane %v52, %v56
  %59 = vmatprep.subr.mxu0 0.0
  %60 = vmatpush1.msra.mxu0 %v36
  %61 = vmatprep.subr.mxu0 0.0
  %62 = vmatpush1.msra.mxu0 %v37
  %63 = vmatprep.subr.mxu0 0.0
  %64 = vmatpush1.msra.mxu0 %v38
  %65 = vmatprep.subr.mxu0 0.0
  %66 = vmatpush1.msra.mxu0 %v39
  %67 = vmatprep.subr.mxu0 0.0
  %68 = vmatpush1.msra.mxu0 %v40
  %69 = vmatprep.subr.mxu0 0.0
  %70 = vmatpush1.msra.mxu0 %v41
  %71 = vmatprep.subr.mxu0 0.0
  %72 = vmatpush1.msra.mxu0 %v42
  %73 = vmatprep.subr.mxu0 0.0
  %74 = vmatpush1.msra.mxu0 %v43
  %75 = vmatprep.subr.mxu0 0.0
  %76 = vmatpush1.msra.mxu0 %v44
  %77 = vmatprep.subr.mxu0 0.0
  %78 = vmatpush1.msra.mxu0 %v45
  %79 = vmatprep.subr.mxu0 0.0
  %80 = vmatpush1.msra.mxu0 %v46
  %81 = vmatprep.subr.mxu0 0.0
  %82 = vmatpush1.msra.mxu0 %v47
  %83 = vmatprep.subr.mxu0 0.0
  %84 = vmatpush1.msra.mxu0 %v48
  %85 = vmatprep.subr.mxu0 0.0
  %86 = vmatpush1.msra.mxu0 %v49
  %87 = vmatprep.subr.mxu0 0.0
  %88 = vmatpush1.msra.mxu0 %v50
  %89 = vmatprep.subr.mxu0 0.0
  %90 = vmatpush1.msra.mxu0 %v51
  %91 = vmatprep.subr.mxu0 0.0
  %92 = vmatpush1.msra.mxu0 0.0
  %93 = vmatprep.subr.mxu0 0.0
  %94 = vmatpush1.msra.mxu0 0.0
  %95 = vmatprep.subr.mxu0 0.0
  %96 = vmatpush1.msra.mxu0 0.0
  %97 = vmatprep.subr.mxu0 0.0
  %98 = vmatpush1.msra.mxu0 0.0
  %99 = vmatprep.subr.mxu0 0.0
  %100 = vmatpush1.msra.mxu0 0.0
  %101 = vmatprep.subr.mxu0 0.0
  %102 = vmatpush1.msra.mxu0 0.0
  %103 = vmatprep.subr.mxu0 0.0
  %104 = vmatpush1.msra.mxu0 0.0
  %105 = vmatprep.subr.mxu0 0.0
  %106 = vmatpush1.msra.mxu0 0.0
  %107 = vmatprep.subr.mxu0 0.0
  %108 = vmatpush1.msra.mxu0 0.0
  %109 = vmatprep.subr.mxu0 0.0
  %110 = vmatpush1.msra.mxu0 0.0
  %111 = vmatprep.subr.mxu0 0.0
  %112 = vmatpush1.msra.mxu0 0.0
  %113 = vmatprep.subr.mxu0 0.0
  %114 = vmatpush1.msra.mxu0 0.0
  %115 = vmatprep.subr.mxu0 0.0
  %116 = vmatpush1.msra.mxu0 0.0
  %117 = vmatprep.subr.mxu0 0.0
  %118 = vmatpush1.msra.mxu0 0.0
  %119 = vmatprep.subr.mxu0 0.0
  %120 = vmatpush1.msra.mxu0 0.0
  %121 = vmatprep.subr.mxu0 0.0
  %122 = vmatpush1.msra.mxu0 0.0
  %123 = vmatprep.mubr.f32.mxu0 0.0
  %124 = vmatmul.mubr.f32.gmra.mrb[0].mxu0 %v20
  %v125 = vpop.f32.mrb[0].mxu0
  %v126 = vadd.f32 %v57, %v125
  %v127 = vpop.f32.mrb[0].mxu0
  %128 = vmatprep.mubr.f32.mxu0 0.0
  %129 = vmatmul.mubr.f32.gmra.mrb[0].mxu0 %v21
  %v130 = vpop.f32.mrb[0].mxu0
  %v131 = vadd.f32 %v57, %v130
  %v132 = vpop.f32.mrb[0].mxu0
  %133 = vmatprep.mubr.f32.mxu0 0.0
  %134 = vmatmul.mubr.f32.gmra.mrb[0].mxu0 %v22
  %v135 = vpop.f32.mrb[0].mxu0
  %v136 = vadd.f32 %v57, %v135
  %v137 = vpop.f32.mrb[0].mxu0
  %138 = vmatprep.mubr.f32.mxu0 0.0
  %139 = vmatmul.mubr.f32.gmra.mrb[0].mxu0 %v23
  %v140 = vpop.f32.mrb[0].mxu0
  %v141 = vadd.f32 %v57, %v140
  %v142 = vpop.f32.mrb[0].mxu0
  %143 = vmatprep.mubr.f32.mxu0 0.0
  %144 = vmatmul.mubr.f32.gmra.mrb[0].mxu0 %v24
  %v145 = vpop.f32.mrb[0].mxu0
  %v146 = vadd.f32 %v57, %v145
  %v147 = vpop.f32.mrb[0].mxu0
  %148 = vmatprep.mubr.f32.mxu0 0.0
  %149 = vmatmul.mubr.f32.gmra.mrb[0].mxu0 %v25
  %v150 = vpop.f32.mrb[0].mxu0
  %v151 = vadd.f32 %v57, %v150
  %v152 = vpop.f32.mrb[0].mxu0
  %153 = vmatprep.mubr.f32.mxu0 0.0
  %154 = vmatmul.mubr.f32.gmra.mrb[0].mxu0 %v26
  %v155 = vpop.f32.mrb[0].mxu0
  %v156 = vadd.f32 %v57, %v155
  %v157 = vpop.f32.mrb[0].mxu0
  %158 = vmatprep.mubr.f32.mxu0 0.0
  %159 = vmatmul.mubr.f32.gmra.mrb[0].mxu0 %v27
  %v160 = vpop.f32.mrb[0].mxu0
  %v161 = vadd.f32 %v57, %v160
  %v162 = vpop.f32.mrb[0].mxu0
  %163 = vmatprep.mubr.f32.mxu0 0.0
  %164 = vmatmul.mubr.f32.gmra.mrb[0].mxu0 %v28
  %v165 = vpop.f32.mrb[0].mxu0
  %v166 = vadd.f32 %v57, %v165
  %v167 = vpop.f32.mrb[0].mxu0
  %168 = vmatprep.mubr.f32.mxu0 0.0
  %169 = vmatmul.mubr.f32.gmra.mrb[0].mxu0 %v29
  %v170 = vpop.f32.mrb[0].mxu0
  %v171 = vadd.f32 %v57, %v170
  %v172 = vpop.f32.mrb[0].mxu0
  %173 = vmatprep.mubr.f32.mxu0 0.0
  %174 = vmatmul.mubr.f32.gmra.mrb[0].mxu0 %v30
  %v175 = vpop.f32.mrb[0].mxu0
  %v176 = vadd.f32 %v57, %v175
  %v177 = vpop.f32.mrb[0].mxu0
  %178 = vmatprep.mubr.f32.mxu0 0.0
  %179 = vmatmul.mubr.f32.gmra.mrb[0].mxu0 %v31
  %v180 = vpop.f32.mrb[0].mxu0
  %v181 = vadd.f32 %v57, %v180
  %v182 = vpop.f32.mrb[0].mxu0
  %183 = vmatprep.mubr.f32.mxu0 0.0
  %184 = vmatmul.mubr.f32.gmra.mrb[0].mxu0 %v32
  %v185 = vpop.f32.mrb[0].mxu0
  %v186 = vadd.f32 %v57, %v185
  %v187 = vpop.f32.mrb[0].mxu0
  %188 = vmatprep.mubr.f32.mxu0 0.0
  %189 = vmatmul.mubr.f32.gmra.mrb[0].mxu0 %v33
  %v190 = vpop.f32.mrb[0].mxu0
  %v191 = vadd.f32 %v57, %v190
  %v192 = vpop.f32.mrb[0].mxu0
  %193 = vmatprep.mubr.f32.mxu0 0.0
  %194 = vmatmul.mubr.f32.gmra.mrb[0].mxu0 %v34
  %v195 = vpop.f32.mrb[0].mxu0
  %v196 = vadd.f32 %v57, %v195
  %v197 = vpop.f32.mrb[0].mxu0
  %198 = vmatprep.mubr.f32.mxu0 0.0
  %199 = vmatmul.mubr.f32.gmra.mrb[0].mxu0 %v35
  %v200 = vpop.f32.mrb[0].mxu0
  %v201 = vadd.f32 %v57, %v200
  %v202 = vpop.f32.mrb[0].mxu0
  %203 = vdwg.mxu0
  %v204 = vmul.f32 %v126, 0.5
  %v205 = vmul.f32 %v131, 0.5
  %v206 = vmul.f32 %v136, 0.5
  %v207 = vmul.f32 %v141, 0.5
  %v208 = vmul.f32 %v146, 0.5
  %v209 = vmul.f32 %v151, 0.5
  %v210 = vmul.f32 %v156, 0.5
  %v211 = vmul.f32 %v161, 0.5
  %v212 = vmul.f32 %v166, 0.5
  %v213 = vmul.f32 %v171, 0.5
  %v214 = vmul.f32 %v176, 0.5
  %v215 = vmul.f32 %v181, 0.5
  %v216 = vmul.f32 %v186, 0.5
  %v217 = vmul.f32 %v191, 0.5
  %v218 = vmul.f32 %v196, 0.5
  %v219 = vmul.f32 %v201, 0.5
  %v220 = vmul.f32 %v126, 0.70710677
  %v221 = vmul.f32 %v131, 0.70710677
  %v222 = vmul.f32 %v136, 0.70710677
  %v223 = vmul.f32 %v141, 0.70710677
  %v224 = vmul.f32 %v146, 0.70710677
  %v225 = vmul.f32 %v151, 0.70710677
  %v226 = vmul.f32 %v156, 0.70710677
  %v227 = vmul.f32 %v161, 0.70710677
  %v228 = vmul.f32 %v166, 0.70710677
  %v229 = vmul.f32 %v171, 0.70710677
  %v230 = vmul.f32 %v176, 0.70710677
  %v231 = vmul.f32 %v181, 0.70710677
  %v232 = vmul.f32 %v186, 0.70710677
  %v233 = vmul.f32 %v191, 0.70710677
  %v234 = vmul.f32 %v196, 0.70710677
  %v235 = vmul.f32 %v201, 0.70710677
  %v236 = verf.f32.pop %v220
  %v237 = verf.f32.pop %v221
  %v238 = verf.f32.pop %v222
  %v239 = verf.f32.pop %v223
  %v240 = verf.f32.pop %v224
  %v241 = verf.f32.pop %v225
  %v242 = verf.f32.pop %v226
  %v243 = verf.f32.pop %v227
  %v244 = verf.f32.pop %v228
  %v245 = verf.f32.pop %v229
  %v246 = verf.f32.pop %v230
  %v247 = verf.f32.pop %v231
  %v248 = verf.f32.pop %v232
  %v249 = verf.f32.pop %v233
  %v250 = verf.f32.pop %v234
  %v251 = verf.f32.pop %v235
  %v252 = vadd.f32 %v236, 1.0
  %v253 = vadd.f32 %v237, 1.0
  %v254 = vadd.f32 %v238, 1.0
  %v255 = vadd.f32 %v239, 1.0
  %v256 = vadd.f32 %v240, 1.0
  %v257 = vadd.f32 %v241, 1.0
  %v258 = vadd.f32 %v242, 1.0
  %v259 = vadd.f32 %v243, 1.0
  %v260 = vadd.f32 %v244, 1.0
  %v261 = vadd.f32 %v245, 1.0
  %v262 = vadd.f32 %v246, 1.0
  %v263 = vadd.f32 %v247, 1.0
  %v264 = vadd.f32 %v248, 1.0
  %v265 = vadd.f32 %v249, 1.0
  %v266 = vadd.f32 %v250, 1.0
  %v267 = vadd.f32 %v251, 1.0
  %v268 = vmul.f32 %v204, %v252
  %v269 = vmul.f32 %v205, %v253
  %v270 = vmul.f32 %v206, %v254
  %v271 = vmul.f32 %v207, %v255
  %v272 = vmul.f32 %v208, %v256
  %v273 = vmul.f32 %v209, %v257
  %v274 = vmul.f32 %v210, %v258
  %v275 = vmul.f32 %v211, %v259
  %v276 = vmul.f32 %v212, %v260
  %v277 = vmul.f32 %v213, %v261
  %v278 = vmul.f32 %v214, %v262
  %v279 = vmul.f32 %v215, %v263
  %v280 = vmul.f32 %v216, %v264
  %v281 = vmul.f32 %v217, %v265
  %v282 = vmul.f32 %v218, %v266
  %v283 = vmul.f32 %v219, %v267
  %v284 = vld [vmem:[%s3] sm:$0xff]
  %v285 = vld [vmem:[%s3 + $0x8] sm:$0xff]
  %v286 = vld [vmem:[%s3 + $0x10] sm:$0xff]
  %v287 = vld [vmem:[%s3 + $0x18] sm:$0xff]
  %v288 = vld [vmem:[%s3 + $0x20] sm:$0xff]
  %v289 = vld [vmem:[%s3 + $0x28] sm:$0xff]
  %v290 = vld [vmem:[%s3 + $0x30] sm:$0xff]
  %v291 = vld [vmem:[%s3 + $0x38] sm:$0xff]
  %v292 = vld [vmem:[%s3 + $0x40] sm:$0xff]
  %v293 = vld [vmem:[%s3 + $0x48] sm:$0xff]
  %v294 = vld [vmem:[%s3 + $0x50] sm:$0xff]
  %v295 = vld [vmem:[%s3 + $0x58] sm:$0xff]
  %v296 = vld [vmem:[%s3 + $0x60] sm:$0xff]
  %v297 = vld [vmem:[%s3 + $0x68] sm:$0xff]
  %v298 = vld [vmem:[%s3 + $0x70] sm:$0xff]
  %v299 = vld [vmem:[%s3 + $0x78] sm:$0xff]
  %v300 = vld [vmem:[%s4] sm:$0x1]
  %v302 = vlaneseq
  %v303 = vshrl.u32 %v302, 7
  %v304 = vsub.s32 0, %v303
  %v305 = vrot.slane %v300, %v304
  %307 = vmatprep.subr.mxu0 0.0
  %308 = vmatpush1.msra.mxu0 %v284
  %309 = vmatprep.subr.mxu0 0.0
  %310 = vmatpush1.msra.mxu0 %v285
  %311 = vmatprep.subr.mxu0 0.0
  %312 = vmatpush1.msra.mxu0 %v286
  %313 = vmatprep.subr.mxu0 0.0
  %314 = vmatpush1.msra.mxu0 %v287
  %315 = vmatprep.subr.mxu0 0.0
  %316 = vmatpush1.msra.mxu0 %v288
  %317 = vmatprep.subr.mxu0 0.0
  %318 = vmatpush1.msra.mxu0 %v289
  %319 = vmatprep.subr.mxu0 0.0
  %320 = vmatpush1.msra.mxu0 %v290
  %321 = vmatprep.subr.mxu0 0.0
  %322 = vmatpush1.msra.mxu0 %v291
  %323 = vmatprep.subr.mxu0 0.0
  %324 = vmatpush1.msra.mxu0 %v292
  %325 = vmatprep.subr.mxu0 0.0
  %326 = vmatpush1.msra.mxu0 %v293
  %327 = vmatprep.subr.mxu0 0.0
  %328 = vmatpush1.msra.mxu0 %v294
  %329 = vmatprep.subr.mxu0 0.0
  %330 = vmatpush1.msra.mxu0 %v295
  %331 = vmatprep.subr.mxu0 0.0
  %332 = vmatpush1.msra.mxu0 %v296
  %333 = vmatprep.subr.mxu0 0.0
  %334 = vmatpush1.msra.mxu0 %v297
  %335 = vmatprep.subr.mxu0 0.0
  %336 = vmatpush1.msra.mxu0 %v298
  %337 = vmatprep.subr.mxu0 0.0
  %338 = vmatpush1.msra.mxu0 %v299
  %339 = vmatprep.subr.mxu0 0.0
  %340 = vmatpush1.msra.mxu0 0.0
  %341 = vmatprep.subr.mxu0 0.0
  %342 = vmatpush1.msra.mxu0 0.0
  %343 = vmatprep.subr.mxu0 0.0
  %344 = vmatpush1.msra.mxu0 0.0
  %345 = vmatprep.subr.mxu0 0.0
  %346 = vmatpush1.msra.mxu0 0.0
  %347 = vmatprep.subr.mxu0 0.0
  %348 = vmatpush1.msra.mxu0 0.0
  %349 = vmatprep.subr.mxu0 0.0
  %350 = vmatpush1.msra.mxu0 0.0
  %351 = vmatprep.subr.mxu0 0.0
  %352 = vmatpush1.msra.mxu0 0.0
  %353 = vmatprep.subr.mxu0 0.0
  %354 = vmatpush1.msra.mxu0 0.0
  %355 = vmatprep.subr.mxu0 0.0
  %356 = vmatpush1.msra.mxu0 0.0
  %357 = vmatprep.subr.mxu0 0.0
  %358 = vmatpush1.msra.mxu0 0.0
  %359 = vmatprep.subr.mxu0 0.0
  %360 = vmatpush1.msra.mxu0 0.0
  %361 = vmatprep.subr.mxu0 0.0
  %362 = vmatpush1.msra.mxu0 0.0
  %363 = vmatprep.subr.mxu0 0.0
  %364 = vmatpush1.msra.mxu0 0.0
  %365 = vmatprep.subr.mxu0 0.0
  %366 = vmatpush1.msra.mxu0 0.0
  %367 = vmatprep.subr.mxu0 0.0
  %368 = vmatpush1.msra.mxu0 0.0
  %369 = vmatprep.subr.mxu0 0.0
  %370 = vmatpush1.msra.mxu0 0.0
  %371 = vmatprep.mubr.f32.mxu0 0.0
  %372 = vmatmul.mubr.f32.gmra.mrb[0].mxu0 %v268
  %v373 = vpop.f32.mrb[0].mxu0
  %v374 = vadd.f32 %v305, %v373
  %v375 = vpop.f32.mrb[0].mxu0
  %376 = vmatprep.mubr.f32.mxu0 0.0
  %377 = vmatmul.mubr.f32.gmra.mrb[0].mxu0 %v269
  %v378 = vpop.f32.mrb[0].mxu0
  %v379 = vadd.f32 %v305, %v378
  %v380 = vpop.f32.mrb[0].mxu0
  %381 = vmatprep.mubr.f32.mxu0 0.0
  %382 = vmatmul.mubr.f32.gmra.mrb[0].mxu0 %v270
  %v383 = vpop.f32.mrb[0].mxu0
  %v384 = vadd.f32 %v305, %v383
  %v385 = vpop.f32.mrb[0].mxu0
  %386 = vmatprep.mubr.f32.mxu0 0.0
  %387 = vmatmul.mubr.f32.gmra.mrb[0].mxu0 %v271
  %v388 = vpop.f32.mrb[0].mxu0
  %v389 = vadd.f32 %v305, %v388
  %v390 = vpop.f32.mrb[0].mxu0
  %391 = vmatprep.mubr.f32.mxu0 0.0
  %392 = vmatmul.mubr.f32.gmra.mrb[0].mxu0 %v272
  %v393 = vpop.f32.mrb[0].mxu0
  %v394 = vadd.f32 %v305, %v393
  %v395 = vpop.f32.mrb[0].mxu0
  %396 = vmatprep.mubr.f32.mxu0 0.0
  %397 = vmatmul.mubr.f32.gmra.mrb[0].mxu0 %v273
  %v398 = vpop.f32.mrb[0].mxu0
  %v399 = vadd.f32 %v305, %v398
  %v400 = vpop.f32.mrb[0].mxu0
  %401 = vmatprep.mubr.f32.mxu0 0.0
  %402 = vmatmul.mubr.f32.gmra.mrb[0].mxu0 %v274
  %v403 = vpop.f32.mrb[0].mxu0
  %v404 = vadd.f32 %v305, %v403
  %v405 = vpop.f32.mrb[0].mxu0
  %406 = vmatprep.mubr.f32.mxu0 0.0
  %407 = vmatmul.mubr.f32.gmra.mrb[0].mxu0 %v275
  %v408 = vpop.f32.mrb[0].mxu0
  %v409 = vadd.f32 %v305, %v408
  %v410 = vpop.f32.mrb[0].mxu0
  %411 = vmatprep.mubr.f32.mxu0 0.0
  %412 = vmatmul.mubr.f32.gmra.mrb[0].mxu0 %v276
  %v413 = vpop.f32.mrb[0].mxu0
  %v414 = vadd.f32 %v305, %v413
  %v415 = vpop.f32.mrb[0].mxu0
  %416 = vmatprep.mubr.f32.mxu0 0.0
  %417 = vmatmul.mubr.f32.gmra.mrb[0].mxu0 %v277
  %v418 = vpop.f32.mrb[0].mxu0
  %v419 = vadd.f32 %v305, %v418
  %v420 = vpop.f32.mrb[0].mxu0
  %421 = vmatprep.mubr.f32.mxu0 0.0
  %422 = vmatmul.mubr.f32.gmra.mrb[0].mxu0 %v278
  %v423 = vpop.f32.mrb[0].mxu0
  %v424 = vadd.f32 %v305, %v423
  %v425 = vpop.f32.mrb[0].mxu0
  %426 = vmatprep.mubr.f32.mxu0 0.0
  %427 = vmatmul.mubr.f32.gmra.mrb[0].mxu0 %v279
  %v428 = vpop.f32.mrb[0].mxu0
  %v429 = vadd.f32 %v305, %v428
  %v430 = vpop.f32.mrb[0].mxu0
  %431 = vmatprep.mubr.f32.mxu0 0.0
  %432 = vmatmul.mubr.f32.gmra.mrb[0].mxu0 %v280
  %v433 = vpop.f32.mrb[0].mxu0
  %v434 = vadd.f32 %v305, %v433
  %v435 = vpop.f32.mrb[0].mxu0
  %436 = vmatprep.mubr.f32.mxu0 0.0
  %437 = vmatmul.mubr.f32.gmra.mrb[0].mxu0 %v281
  %v438 = vpop.f32.mrb[0].mxu0
  %v439 = vadd.f32 %v305, %v438
  %v440 = vpop.f32.mrb[0].mxu0
  %441 = vmatprep.mubr.f32.mxu0 0.0
  %442 = vmatmul.mubr.f32.gmra.mrb[0].mxu0 %v282
  %v443 = vpop.f32.mrb[0].mxu0
  %v444 = vadd.f32 %v305, %v443
  %v445 = vpop.f32.mrb[0].mxu0
  %446 = vmatprep.mubr.f32.mxu0 0.0
  %447 = vmatmul.mubr.f32.gmra.mrb[0].mxu0 %v283
  %v448 = vpop.f32.mrb[0].mxu0
  %v449 = vadd.f32 %v305, %v448
  %v450 = vpop.f32.mrb[0].mxu0
  %451 = vdwg.mxu0
  %v452 = vmul.f32 %v374, 0.5
  %v453 = vmul.f32 %v379, 0.5
  %v454 = vmul.f32 %v384, 0.5
  %v455 = vmul.f32 %v389, 0.5
  %v456 = vmul.f32 %v394, 0.5
  %v457 = vmul.f32 %v399, 0.5
  %v458 = vmul.f32 %v404, 0.5
  %v459 = vmul.f32 %v409, 0.5
  %v460 = vmul.f32 %v414, 0.5
  %v461 = vmul.f32 %v419, 0.5
  %v462 = vmul.f32 %v424, 0.5
  %v463 = vmul.f32 %v429, 0.5
  %v464 = vmul.f32 %v434, 0.5
  %v465 = vmul.f32 %v439, 0.5
  %v466 = vmul.f32 %v444, 0.5
  %v467 = vmul.f32 %v449, 0.5
  %v468 = vmul.f32 %v374, 0.70710677
  %v469 = vmul.f32 %v379, 0.70710677
  %v470 = vmul.f32 %v384, 0.70710677
  %v471 = vmul.f32 %v389, 0.70710677
  %v472 = vmul.f32 %v394, 0.70710677
  %v473 = vmul.f32 %v399, 0.70710677
  %v474 = vmul.f32 %v404, 0.70710677
  %v475 = vmul.f32 %v409, 0.70710677
  %v476 = vmul.f32 %v414, 0.70710677
  %v477 = vmul.f32 %v419, 0.70710677
  %v478 = vmul.f32 %v424, 0.70710677
  %v479 = vmul.f32 %v429, 0.70710677
  %v480 = vmul.f32 %v434, 0.70710677
  %v481 = vmul.f32 %v439, 0.70710677
  %v482 = vmul.f32 %v444, 0.70710677
  %v483 = vmul.f32 %v449, 0.70710677
  %v484 = verf.f32.pop %v468
  %v485 = verf.f32.pop %v469
  %v486 = verf.f32.pop %v470
  %v487 = verf.f32.pop %v471
  %v488 = verf.f32.pop %v472
  %v489 = verf.f32.pop %v473
  %v490 = verf.f32.pop %v474
  %v491 = verf.f32.pop %v475
  %v492 = verf.f32.pop %v476
  %v493 = verf.f32.pop %v477
  %v494 = verf.f32.pop %v478
  %v495 = verf.f32.pop %v479
  %v496 = verf.f32.pop %v480
  %v497 = verf.f32.pop %v481
  %v498 = verf.f32.pop %v482
  %v499 = verf.f32.pop %v483
  %v500 = vadd.f32 %v484, 1.0
  %v501 = vadd.f32 %v485, 1.0
  %v502 = vadd.f32 %v486, 1.0
  %v503 = vadd.f32 %v487, 1.0
  %v504 = vadd.f32 %v488, 1.0
  %v505 = vadd.f32 %v489, 1.0
  %v506 = vadd.f32 %v490, 1.0
  %v507 = vadd.f32 %v491, 1.0
  %v508 = vadd.f32 %v492, 1.0
  %v509 = vadd.f32 %v493, 1.0
  %v510 = vadd.f32 %v494, 1.0
  %v511 = vadd.f32 %v495, 1.0
  %v512 = vadd.f32 %v496, 1.0
  %v513 = vadd.f32 %v497, 1.0
  %v514 = vadd.f32 %v498, 1.0
  %v515 = vadd.f32 %v499, 1.0
  %v516 = vmul.f32 %v452, %v500
  %v517 = vmul.f32 %v453, %v501
  %v518 = vmul.f32 %v454, %v502
  %v519 = vmul.f32 %v455, %v503
  %v520 = vmul.f32 %v456, %v504
  %v521 = vmul.f32 %v457, %v505
  %v522 = vmul.f32 %v458, %v506
  %v523 = vmul.f32 %v459, %v507
  %v524 = vmul.f32 %v460, %v508
  %v525 = vmul.f32 %v461, %v509
  %v526 = vmul.f32 %v462, %v510
  %v527 = vmul.f32 %v463, %v511
  %v528 = vmul.f32 %v464, %v512
  %v529 = vmul.f32 %v465, %v513
  %v530 = vmul.f32 %v466, %v514
  %v531 = vmul.f32 %v467, %v515
  %532 = vst [vmem:[%s5] sm:$0xff] %v516
  %533 = vst [vmem:[%s5 + $0x8] sm:$0xff] %v517
  %534 = vst [vmem:[%s5 + $0x10] sm:$0xff] %v518
  %535 = vst [vmem:[%s5 + $0x18] sm:$0xff] %v519
  %536 = vst [vmem:[%s5 + $0x20] sm:$0xff] %v520
  %537 = vst [vmem:[%s5 + $0x28] sm:$0xff] %v521
  %538 = vst [vmem:[%s5 + $0x30] sm:$0xff] %v522
  %539 = vst [vmem:[%s5 + $0x38] sm:$0xff] %v523
  %540 = vst [vmem:[%s5 + $0x40] sm:$0xff] %v524
  %541 = vst [vmem:[%s5 + $0x48] sm:$0xff] %v525
  %542 = vst [vmem:[%s5 + $0x50] sm:$0xff] %v526
  %543 = vst [vmem:[%s5 + $0x58] sm:$0xff] %v527
  %544 = vst [vmem:[%s5 + $0x60] sm:$0xff] %v528
  %545 = vst [vmem:[%s5 + $0x68] sm:$0xff] %v529
  %546 = vst [vmem:[%s5 + $0x70] sm:$0xff] %v530
  %547 = vst [vmem:[%s5 + $0x78] sm:$0xff] %v531
  // Predicated region
  $region22: #{_mlp_forward_impl.1} parent=0 // pred_check
    _
  $region23: #{_mlp_forward_impl.1} parent=0 // pred_check_branch
    %549 = sbr.rel (0) target = $region25
  $region24: #{_mlp_forward_impl.1} parent=0 // pred_region
    _
  $region25: #{_mlp_forward_impl.1} parent=0 // pred_fallthru
    _
  // Predicated region
  $region26: #{_mlp_forward_impl.1} parent=0 // pred_check
    _
  $region27: #{_mlp_forward_impl.1} parent=0 // pred_check_branch
    %551 = sbr.rel (0) target = $region29
  $region28: #{_mlp_forward_impl.1} parent=0 // pred_region
    _
  $region29: #{_mlp_forward_impl.1} parent=0 // pred_fallthru
    _

</llo_original>
